<compile_context>
chip_gen: v7x
topology: tpu7x:2x2x1
jax: 0.10.0
libtpu: 0.0.40
codegen_flags: <defaults>
</compile_context>

<pallas_src>
import jax
import jax.numpy as jnp
from jax.experimental import pallas as pl
from jax.experimental.pallas import tpu as pltpu

_LANE = 128


def _round_up(x: int, m: int) -> int:
    return ((x + m - 1) // m) * m


def _policy_kernel(obs_ref, w1_ref, b1_ref, w2_ref, b2_ref, w3_ref, b3_ref, out_ref):
    """Whole MLP for one batch tile: 3 matmuls + 2 ReLUs + tanh, all in VMEM."""
    # Cast obs to the weight dtype (bf16 MXU fast path); accumulate in f32.
    x = obs_ref[...].astype(w1_ref.dtype)

    # layer 1: Linear + ReLU
    h1 = jnp.dot(x, w1_ref[...], preferred_element_type=jnp.float32) + b1_ref[...]
    h1 = jnp.maximum(h1, 0.0)

    # layer 2: Linear + ReLU
    h2 = jnp.dot(h1.astype(w2_ref.dtype), w2_ref[...],
                 preferred_element_type=jnp.float32) + b2_ref[...]
    h2 = jnp.maximum(h2, 0.0)

    # layer 3: Linear + Tanh (output activation) — unpadded act_dim lanes.
    y = jnp.dot(h2.astype(w3_ref.dtype), w3_ref[...],
                preferred_element_type=jnp.float32) + b3_ref[...]
    out_ref[...] = jnp.tanh(y).astype(out_ref.dtype)


def prepare_params(params, *, use_bf16: bool = True):
    """Pad the hidden dim to 128 lanes and cast weights ONCE (not per call).

    Padding is exact: zero weight rows/cols + zero bias -> zero activations,
    and those zero hidden lanes contribute nothing downstream.  state_dim and
    act_dim stay unpadded (they only touch the streamed obs / output).
    """
    w_dtype = jnp.bfloat16 if use_bf16 else jnp.float32
    S, H = params["w1"].shape
    A = params["w3"].shape[1]
    H_p = _round_up(H, _LANE)

    def pad_w(a, rows, cols):
        a = a.astype(w_dtype)
        return jnp.pad(a, ((0, rows - a.shape[0]), (0, cols - a.shape[1])))

    def pad_b(a, cols):
        a = a.astype(jnp.float32).reshape(1, -1)
        return jnp.pad(a, ((0, 0), (0, cols - a.shape[1])))

    return {
        "w1": pad_w(params["w1"], S, H_p),
        "b1": pad_b(params["b1"], H_p),
        "w2": pad_w(params["w2"], H_p, H_p),
        "b2": pad_b(params["b2"], H_p),
        "w3": pad_w(params["w3"], H_p, A),
        "b3": pad_b(params["b3"], A),
        "dims": (S, H, A),
    }


def deterministic_policy_forward(obs, prepared, *, batch_tile: int | None = None):
    """obs: (B, state_dim). prepared: output of prepare_params().

    Returns (B, act_dim) float32.  No wrapper-side copies of obs or output.
    """
    S, H, A = prepared["dims"]
    B, S_in = obs.shape
    assert S_in == S, f"obs last dim {S_in} != state_dim {S}"
    H_p = prepared["w1"].shape[1]

    obs_isz = jnp.dtype(obs.dtype).itemsize
    w_isz = jnp.dtype(prepared["w1"].dtype).itemsize
    sublane = 16 if obs.dtype == jnp.bfloat16 else 8

    # Batch tile: cap at 1024; by default aim for >= 2 grid steps so a v7x
    # megacore can put work on both TensorCores (no-op on v5e/v6e, 1 TC).
    max_tile = 1024
    if batch_tile is None:
        if B > sublane:
            batch_tile = min(max_tile, _round_up(pl.cdiv(B, 2), sublane))
        else:
            batch_tile = sublane
    TB = max(sublane, min(_round_up(batch_tile, sublane), _round_up(B, sublane)))
    grid = (pl.cdiv(B, TB),)

    # Scoped-VMEM budget: double-buffered obs/out blocks + double-buffered
    # resident weights/biases + the TBxH_p f32 intermediates, with headroom.
    need = (2 * TB * S * obs_isz
            + 2 * TB * A * 4
            + 2 * ((S * H_p + H_p * H_p + H_p * A) * w_isz + (2 * H_p + A) * 4)
            + 2 * TB * H_p * 4)
    vmem_limit = int(min(64 << 20, max(2 * need + (4 << 20), 16 << 20)))

    cost = pl.CostEstimate(
        flops=2 * B * (S * H + H * H + H * A),
        transcendentals=B * A,  # tanh
        bytes_accessed=int(B * S * obs_isz + B * A * 4
                           + (S * H_p + H_p * H_p + H_p * A) * w_isz
                           + (2 * H_p + A) * 4),
    )

    const = lambda i: (0, 0)  # weights/biases resident across all grid steps

    out = pl.pallas_call(
        _policy_kernel,
        out_shape=jax.ShapeDtypeStruct((B, A), jnp.float32),
        grid=grid,
        in_specs=[
            pl.BlockSpec((TB, S), lambda i: (i, 0)),   # obs tile streams in, unpadded
            pl.BlockSpec((S, H_p), const),
            pl.BlockSpec((1, H_p), const),
            pl.BlockSpec((H_p, H_p), const),
            pl.BlockSpec((1, H_p), const),
            pl.BlockSpec((H_p, A), const),
            pl.BlockSpec((1, A), const),
        ],
        out_specs=pl.BlockSpec((TB, A), lambda i: (i, 0)),   # unpadded writeback
        compiler_params=pltpu.CompilerParams(
            dimension_semantics=("parallel",),   # batch axis -> megacore shard on v7x
            vmem_limit_bytes=vmem_limit,
        ),
        cost_estimate=cost,
    )(obs, prepared["w1"], prepared["b1"], prepared["w2"], prepared["b2"],
      prepared["w3"], prepared["b3"])

    return out


def init_params(key, state_dim, hidden_dim, act_dim):
    """Deterministic synthetic init (PyTorch-Linear-like uniform bounds)."""
    ks = jax.random.split(key, 6)

    def lin(kw, kb, fan_in, fan_out):
        bound = 1.0 / jnp.sqrt(jnp.float32(fan_in))
        w = jax.random.uniform(kw, (fan_in, fan_out), jnp.float32, -bound, bound)
        b = jax.random.uniform(kb, (1, fan_out), jnp.float32, -bound, bound)
        return w, b

    w1, b1 = lin(ks[0], ks[1], state_dim, hidden_dim)
    w2, b2 = lin(ks[2], ks[3], hidden_dim, hidden_dim)
    w3, b3 = lin(ks[4], ks[5], hidden_dim, act_dim)
    return {"w1": w1, "b1": b1, "w2": w2, "b2": b2, "w3": w3, "b3": b3}


def reference_forward(obs, p):
    h1 = jnp.maximum(obs @ p["w1"] + p["b1"], 0.0)
    h2 = jnp.maximum(h1 @ p["w2"] + p["b2"], 0.0)
    return jnp.tanh(h2 @ p["w3"] + p["b3"])


if __name__ == "__main__":
    key = jax.random.PRNGKey(0)
    k_obs, k_params, k_obs2 = jax.random.split(key, 3)

    # Small shapes consistent with the module (n_hidden=2).
    B, state_dim, hidden_dim, act_dim = 2, 16, 32, 4

    obs = jax.random.normal(k_obs, (B, state_dim), dtype=jnp.float32)
    params = init_params(k_params, state_dim, hidden_dim, act_dim)

    # 1) f32-weight path, single grid step (exact vs reference).
    prep_f32 = prepare_params(params, use_bf16=False)
    out = jax.block_until_ready(deterministic_policy_forward(obs, prep_f32))
    ref = reference_forward(obs, params)
    assert out.shape == (B, act_dim)
    assert jnp.allclose(out, ref, atol=1e-5, rtol=1e-5), "mismatch vs reference (f32)"

    # 2) Multi-step grid with a partial last block (B2 % TB != 0).
    B2 = 21
    obs2 = jax.random.normal(k_obs2, (B2, state_dim), dtype=jnp.float32)
    out2 = jax.block_until_ready(
        deterministic_policy_forward(obs2, prep_f32, batch_tile=8))
    ref2 = reference_forward(obs2, params)
    assert out2.shape == (B2, act_dim)
    assert jnp.allclose(out2, ref2, atol=1e-5, rtol=1e-5), "mismatch vs reference (grid)"

    # 3) Default bf16-weight path (f32 accumulation) — looser tolerance by design.
    prep_bf16 = prepare_params(params)  # use_bf16=True default
    out3 = jax.block_until_ready(deterministic_policy_forward(obs2, prep_bf16))
    assert out3.shape == (B2, act_dim)
    assert jnp.allclose(out3, ref2, atol=5e-2, rtol=5e-2), "mismatch vs reference (bf16)"

    print("KERNEL_OK")
</pallas_src>

<mosaic_0001>
module attributes {stable_mosaic.version = 11 : i64} {
  func.func @_policy_kernel(%arg0: i32, %arg1: memref<8x16xf32, #tpu.memory_space<vmem>>, %arg2: memref<16x128xf32, #tpu.memory_space<vmem>>, %arg3: memref<1x128xf32, #tpu.memory_space<vmem>>, %arg4: memref<128x128xf32, #tpu.memory_space<vmem>>, %arg5: memref<1x128xf32, #tpu.memory_space<vmem>>, %arg6: memref<128x4xf32, #tpu.memory_space<vmem>>, %arg7: memref<1x4xf32, #tpu.memory_space<vmem>>, %arg8: memref<8x4xf32, #tpu.memory_space<vmem>>) attributes {dimension_semantics = [#tpu.dimension_semantics<parallel>], iteration_bounds = array<i64: 1>, scalar_prefetch = 0 : i64, scratch_operands = 0 : i64, tpu.core_type = #tpu.core_type<tc>, window_params = [{transform_indices = @transform_0, window_bounds = array<i64: 8, 16>}, {pipeline_mode = #tpu.pipeline_mode<synchronous>, transform_indices = @transform_1, window_bounds = array<i64: 16, 128>}, {pipeline_mode = #tpu.pipeline_mode<synchronous>, transform_indices = @transform_2, window_bounds = array<i64: 1, 128>}, {pipeline_mode = #tpu.pipeline_mode<synchronous>, transform_indices = @transform_3, window_bounds = array<i64: 128, 128>}, {pipeline_mode = #tpu.pipeline_mode<synchronous>, transform_indices = @transform_4, window_bounds = array<i64: 1, 128>}, {pipeline_mode = #tpu.pipeline_mode<synchronous>, transform_indices = @transform_5, window_bounds = array<i64: 128, 4>}, {pipeline_mode = #tpu.pipeline_mode<synchronous>, transform_indices = @transform_6, window_bounds = array<i64: 1, 4>}, {transform_indices = @transform_7, window_bounds = array<i64: 8, 4>}]} {
    %c0 = arith.constant 0 : index
    %c0_0 = arith.constant 0 : index
    %0 = vector.load %arg1[%c0, %c0_0] : memref<8x16xf32, #tpu.memory_space<vmem>>, vector<8x16xf32>
    %c0_1 = arith.constant 0 : index
    %c0_2 = arith.constant 0 : index
    %1 = vector.load %arg2[%c0_1, %c0_2] : memref<16x128xf32, #tpu.memory_space<vmem>>, vector<16x128xf32>
    %cst = arith.constant dense<0.000000e+00> : vector<8x128xf32>
    %2 = tpu.matmul %0, %1, %cst {dimension_numbers = #tpu.dot_dimension_numbers<[1], [0], [0], [1], [0, 0, 1, 1], [], []>} : vector<8x16xf32>, vector<16x128xf32>, vector<8x128xf32> -> vector<8x128xf32>
    %c0_3 = arith.constant 0 : index
    %c0_4 = arith.constant 0 : index
    %3 = vector.load %arg3[%c0_3, %c0_4] : memref<1x128xf32, #tpu.memory_space<vmem>>, vector<1x128xf32>
    %4 = vector.broadcast %3 : vector<1x128xf32> to vector<8x128xf32>
    %5 = arith.addf %2, %4 : vector<8x128xf32>
    %cst_5 = arith.constant 0.000000e+00 : f32
    %6 = vector.broadcast %cst_5 : f32 to vector<8x128xf32>
    %7 = arith.maximumf %5, %6 : vector<8x128xf32>
    %c0_6 = arith.constant 0 : index
    %c0_7 = arith.constant 0 : index
    %8 = vector.load %arg4[%c0_6, %c0_7] : memref<128x128xf32, #tpu.memory_space<vmem>>, vector<128x128xf32>
    %cst_8 = arith.constant dense<0.000000e+00> : vector<8x128xf32>
    %9 = tpu.matmul %7, %8, %cst_8 {dimension_numbers = #tpu.dot_dimension_numbers<[1], [0], [0], [1], [0, 0, 1, 1], [], []>} : vector<8x128xf32>, vector<128x128xf32>, vector<8x128xf32> -> vector<8x128xf32>
    %c0_9 = arith.constant 0 : index
    %c0_10 = arith.constant 0 : index
    %10 = vector.load %arg5[%c0_9, %c0_10] : memref<1x128xf32, #tpu.memory_space<vmem>>, vector<1x128xf32>
    %11 = vector.broadcast %10 : vector<1x128xf32> to vector<8x128xf32>
    %12 = arith.addf %9, %11 : vector<8x128xf32>
    %cst_11 = arith.constant 0.000000e+00 : f32
    %13 = vector.broadcast %cst_11 : f32 to vector<8x128xf32>
    %14 = arith.maximumf %12, %13 : vector<8x128xf32>
    %c0_12 = arith.constant 0 : index
    %c0_13 = arith.constant 0 : index
    %15 = vector.load %arg6[%c0_12, %c0_13] : memref<128x4xf32, #tpu.memory_space<vmem>>, vector<128x4xf32>
    %cst_14 = arith.constant dense<0.000000e+00> : vector<8x4xf32>
    %16 = tpu.matmul %14, %15, %cst_14 {dimension_numbers = #tpu.dot_dimension_numbers<[1], [0], [0], [1], [0, 0, 1, 1], [], []>} : vector<8x128xf32>, vector<128x4xf32>, vector<8x4xf32> -> vector<8x4xf32>
    %c0_15 = arith.constant 0 : index
    %c0_16 = arith.constant 0 : index
    %17 = vector.load %arg7[%c0_15, %c0_16] : memref<1x4xf32, #tpu.memory_space<vmem>>, vector<1x4xf32>
    %18 = vector.broadcast %17 : vector<1x4xf32> to vector<8x4xf32>
    %19 = arith.addf %16, %18 : vector<8x4xf32>
    %20 = math.tanh %19 : vector<8x4xf32>
    %c0_17 = arith.constant 0 : index
    %c0_18 = arith.constant 0 : index
    %21 = vector.load %arg8[%c0_17, %c0_18] : memref<8x4xf32, #tpu.memory_space<vmem>>, vector<8x4xf32>
    tpu.vector_store %arg8[%c0_17, %c0_18], %20 {strides = array<i32>} : memref<8x4xf32, #tpu.memory_space<vmem>>, vector<8x4xf32>,
    return
  }
  func.func @transform_0(%arg0: i32) -> (i32, i32) {
    %c0_i32 = arith.constant 0 : i32
    %c0_i32_0 = arith.constant 0 : i32
    return %arg0, %c0_i32 : i32, i32
  }
  func.func @transform_1(%arg0: i32) -> (i32, i32) {
    %c0_i32 = arith.constant 0 : i32
    %c0_i32_0 = arith.constant 0 : i32
    %c0_i32_1 = arith.constant 0 : i32
    return %c0_i32, %c0_i32_0 : i32, i32
  }
  func.func @transform_2(%arg0: i32) -> (i32, i32) {
    %c0_i32 = arith.constant 0 : i32
    %c0_i32_0 = arith.constant 0 : i32
    %c0_i32_1 = arith.constant 0 : i32
    return %c0_i32, %c0_i32_0 : i32, i32
  }
  func.func @transform_3(%arg0: i32) -> (i32, i32) {
    %c0_i32 = arith.constant 0 : i32
    %c0_i32_0 = arith.constant 0 : i32
    %c0_i32_1 = arith.constant 0 : i32
    return %c0_i32, %c0_i32_0 : i32, i32
  }
  func.func @transform_4(%arg0: i32) -> (i32, i32) {
    %c0_i32 = arith.constant 0 : i32
    %c0_i32_0 = arith.constant 0 : i32
    %c0_i32_1 = arith.constant 0 : i32
    return %c0_i32, %c0_i32_0 : i32, i32
  }
  func.func @transform_5(%arg0: i32) -> (i32, i32) {
    %c0_i32 = arith.constant 0 : i32
    %c0_i32_0 = arith.constant 0 : i32
    %c0_i32_1 = arith.constant 0 : i32
    return %c0_i32, %c0_i32_0 : i32, i32
  }
  func.func @transform_6(%arg0: i32) -> (i32, i32) {
    %c0_i32 = arith.constant 0 : i32
    %c0_i32_0 = arith.constant 0 : i32
    %c0_i32_1 = arith.constant 0 : i32
    return %c0_i32, %c0_i32_0 : i32, i32
  }
  func.func @transform_7(%arg0: i32) -> (i32, i32) {
    %c0_i32 = arith.constant 0 : i32
    %c0_i32_0 = arith.constant 0 : i32
    return %arg0, %c0_i32 : i32, i32
  }
}

</mosaic_0001>

<llo_original>
// kernel: tpu_custom_call.1
$region0: #{tpu_custom_call.1}
  #allocation0 [shape = 'u32[]', space=smem, size = 0x4, offset = 0x4, fixed_abs, tag = 'smem constant byte address 0x4 - core index']
  #allocation1 [shape = 'u32[144,128]{1,0:T(1,128)}', space=vmem, size = 0x12000, scoped, tag = 'internal scratch']
  %s0 = inlined_call_operand.vmem [shape: f32[2,16], index: 0, kind: input, shape index: {}]
  %s1 = inlined_call_operand.hbm [shape: f32[16,128], index: 1, kind: input, shape index: {}]
  %s2 = inlined_call_operand.vmem [shape: f32[1,128], index: 2, kind: input, shape index: {}]
  %s3 = inlined_call_operand.vmem [shape: f32[128,128], index: 3, kind: input, shape index: {}]
  %s4 = inlined_call_operand.vmem [shape: f32[1,128], index: 4, kind: input, shape index: {}]
  %s5 = inlined_call_operand.vmem [shape: f32[128,4], index: 5, kind: input, shape index: {}]
  %s6 = inlined_call_operand.vmem [shape: f32[1,4], index: 6, kind: input, shape index: {}]
  %s7 = inlined_call_operand.hbm [shape: f32[2,4], index: 7, kind: output, shape index: {}]
  %s8 = sld [smem:[#allocation0]]
  $region42: #{tpu_custom_call.1} parent=0
    _
  %s10 = ssub.s32 1, %s8
  %s11 = scalar_select 0, %s10, %s8
  $region1: #{tpu_custom_call.1} parent=0
    #allocation2 [shape = 'u8[8192]{0}', space=vmem, size = 0x2000, scoped, tag = 'input window, operand 1, single buffered']
    #allocation3 [shape = 's32[1]{0}', space=sflag, size = 0x4, scoped, tag = 'scoped memory for tpu_custom_call.1']
    #allocation4 [shape = 's32[1]{0}', space=sflag, size = 0x4, scoped, tag = 'scoped memory for tpu_custom_call.1']
    #allocation5 [shape = 'u8[4096]{0}', space=vmem, size = 0x1000, scoped, tag = 'output window, operand 0, single buffered']
    %12 = vsyncpa [#allocation3], 0
    %13 = vsyncpa [#allocation4], 0
    // Predicated region
    $region2: #{tpu_custom_call.1} parent=1 // pred_check
      _
    $region3: #{tpu_custom_call.1} parent=1 // pred_check_branch
      %15 = sbr.rel (0) target = $region5
    $region4: #{tpu_custom_call.1} parent=1 // pred_region
      _
    $region5: #{tpu_custom_call.1} parent=1 // pred_fallthru
      _
    // Predicated region
    $region6: #{tpu_custom_call.1} parent=1 // pred_check
      _
    $region7: #{tpu_custom_call.1} parent=1 // pred_check_branch
      %17 = sbr.rel (0) target = $region9
    $region8: #{tpu_custom_call.1} parent=1 // pred_region
      %s19 = ssub.s32 256, 256
      %20 = vsyncadd [#allocation3], %s19
      %s21 = sshll.u32 [#allocation2], 4
      %s22 = int_to_ptr.vmem [resolvable:$true] %s21
      %27 = dma.hbm_to_vmem [thread:$0]  %s1, 256, %s22, [#allocation3], 128, 128, 8
    $region9: #{tpu_custom_call.1} parent=1 // pred_fallthru
      _
    // Predicated region
    $region10: #{tpu_custom_call.1} parent=1 // pred_check
      _
    $region11: #{tpu_custom_call.1} parent=1 // pred_check_branch
      %29 = sbr.rel (0) target = $region13
    $region12: #{tpu_custom_call.1} parent=1 // pred_region
      _
    $region13: #{tpu_custom_call.1} parent=1 // pred_fallthru
      _
    // Predicated region
    $region14: #{tpu_custom_call.1} parent=1 // pred_check
      _
    $region15: #{tpu_custom_call.1} parent=1 // pred_check_branch
      %31 = sbr.rel (0) target = $region17
    $region16: #{tpu_custom_call.1} parent=1 // pred_region
      _
    $region17: #{tpu_custom_call.1} parent=1 // pred_fallthru
      _
    // Predicated region
    $region18: #{tpu_custom_call.1} parent=1 // pred_check
      _
    $region19: #{tpu_custom_call.1} parent=1 // pred_check_branch
      %33 = sbr.rel (0) target = $region21
    $region20: #{tpu_custom_call.1} parent=1 // pred_region
      _
    $region21: #{tpu_custom_call.1} parent=1 // pred_fallthru
      _
    // Predicated region
    $region22: #{tpu_custom_call.1} parent=1 // pred_check
      _
    $region23: #{tpu_custom_call.1} parent=1 // pred_check_branch
      %35 = sbr.rel (0) target = $region25
    $region24: #{tpu_custom_call.1} parent=1 // pred_region
      _
    $region25: #{tpu_custom_call.1} parent=1 // pred_fallthru
      _
    // Predicated region
    $region26: #{tpu_custom_call.1} parent=1 // pred_check
      _
    $region27: #{tpu_custom_call.1} parent=1 // pred_check_branch
      %37 = sbr.rel (0) target = $region29
    $region28: #{tpu_custom_call.1} parent=1 // pred_region
      _
    $region29: #{tpu_custom_call.1} parent=1 // pred_fallthru
      _
    // Predicated region
    $region30: #{tpu_custom_call.1} parent=1 // pred_check
      _
    $region31: #{tpu_custom_call.1} parent=1 // pred_check_branch
      %39 = sbr.rel (0) target = $region33
    $region32: #{tpu_custom_call.1} parent=1 // pred_region
      %40 = dma.done [#allocation3], 256
    $region33: #{tpu_custom_call.1} parent=1 // pred_fallthru
      _
    %v41 = vld [vmem:[%s0] sm:$0xff]
    %v42 = vld [vmem:[#allocation2] sm:$0xff]
    %v43 = vld [vmem:[#allocation2 + $0x8] sm:$0xff]
    %v44 = vld [vmem:[%s2] sm:$0x1]
    %v46 = vlaneseq
    %v47 = vshrl.u32 %v46, 7
    %v48 = vsub.s32 0, %v47
    %v49 = vrot.slane %v44, %v48
    %vm51 = vcmask 130048
    %v53 = vsel %vm51, %v41, 0
    %55 = vmatprep.subr.mxu0 0.0
    %56 = vmatpush1.msra.mxu0 %v42
    %57 = vmatprep.subr.mxu0 0.0
    %58 = vmatpush1.msra.mxu0 %v43
    %59 = vmatprep.subr.mxu0 0.0
    %60 = vmatpush1.msra.mxu0 0.0
    %61 = vmatprep.subr.mxu0 0.0
    %62 = vmatpush1.msra.mxu0 0.0
    %63 = vmatprep.subr.mxu0 0.0
    %64 = vmatpush1.msra.mxu0 0.0
    %65 = vmatprep.subr.mxu0 0.0
    %66 = vmatpush1.msra.mxu0 0.0
    %67 = vmatprep.subr.mxu0 0.0
    %68 = vmatpush1.msra.mxu0 0.0
    %69 = vmatprep.subr.mxu0 0.0
    %70 = vmatpush1.msra.mxu0 0.0
    %71 = vmatprep.subr.mxu0 0.0
    %72 = vmatpush1.msra.mxu0 0.0
    %73 = vmatprep.subr.mxu0 0.0
    %74 = vmatpush1.msra.mxu0 0.0
    %75 = vmatprep.subr.mxu0 0.0
    %76 = vmatpush1.msra.mxu0 0.0
    %77 = vmatprep.subr.mxu0 0.0
    %78 = vmatpush1.msra.mxu0 0.0
    %79 = vmatprep.subr.mxu0 0.0
    %80 = vmatpush1.msra.mxu0 0.0
    %81 = vmatprep.subr.mxu0 0.0
    %82 = vmatpush1.msra.mxu0 0.0
    %83 = vmatprep.subr.mxu0 0.0
    %84 = vmatpush1.msra.mxu0 0.0
    %85 = vmatprep.subr.mxu0 0.0
    %86 = vmatpush1.msra.mxu0 0.0
    %87 = vmatprep.subr.mxu0 0.0
    %88 = vmatpush1.msra.mxu0 0.0
    %89 = vmatprep.subr.mxu0 0.0
    %90 = vmatpush1.msra.mxu0 0.0
    %91 = vmatprep.subr.mxu0 0.0
    %92 = vmatpush1.msra.mxu0 0.0
    %93 = vmatprep.subr.mxu0 0.0
    %94 = vmatpush1.msra.mxu0 0.0
    %95 = vmatprep.subr.mxu0 0.0
    %96 = vmatpush1.msra.mxu0 0.0
    %97 = vmatprep.subr.mxu0 0.0
    %98 = vmatpush1.msra.mxu0 0.0
    %99 = vmatprep.subr.mxu0 0.0
    %100 = vmatpush1.msra.mxu0 0.0
    %101 = vmatprep.subr.mxu0 0.0
    %102 = vmatpush1.msra.mxu0 0.0
    %103 = vmatprep.subr.mxu0 0.0
    %104 = vmatpush1.msra.mxu0 0.0
    %105 = vmatprep.subr.mxu0 0.0
    %106 = vmatpush1.msra.mxu0 0.0
    %107 = vmatprep.subr.mxu0 0.0
    %108 = vmatpush1.msra.mxu0 0.0
    %109 = vmatprep.subr.mxu0 0.0
    %110 = vmatpush1.msra.mxu0 0.0
    %111 = vmatprep.subr.mxu0 0.0
    %112 = vmatpush1.msra.mxu0 0.0
    %113 = vmatprep.subr.mxu0 0.0
    %114 = vmatpush1.msra.mxu0 0.0
    %115 = vmatprep.subr.mxu0 0.0
    %116 = vmatpush1.msra.mxu0 0.0
    %117 = vmatprep.subr.mxu0 0.0
    %118 = vmatpush1.msra.mxu0 0.0
    %119 = vmatprep.mubr.f32.mxu0 0.0
    %120 = vmatmul.mubr.f32.gmra.mrb[0].mxu0 %v53
    %v121 = vpop.f32.mrb[0].mxu0
    %v122 = vadd.f32 %v49, %v121
    %v123 = vpop.f32.mrb[0].mxu0
    %124 = vdwg.mxu0
    %v125 = vmax.f32 %v122, 0.0
    %v126 = vld [vmem:[%s3] sm:$0xff]
    %v127 = vld [vmem:[%s3 + $0x8] sm:$0xff]
    %v128 = vld [vmem:[%s3 + $0x10] sm:$0xff]
    %v129 = vld [vmem:[%s3 + $0x18] sm:$0xff]
    %v130 = vld [vmem:[%s3 + $0x20] sm:$0xff]
    %v131 = vld [vmem:[%s3 + $0x28] sm:$0xff]
    %v132 = vld [vmem:[%s3 + $0x30] sm:$0xff]
    %v133 = vld [vmem:[%s3 + $0x38] sm:$0xff]
    %v134 = vld [vmem:[%s3 + $0x40] sm:$0xff]
    %v135 = vld [vmem:[%s3 + $0x48] sm:$0xff]
    %v136 = vld [vmem:[%s3 + $0x50] sm:$0xff]
    %v137 = vld [vmem:[%s3 + $0x58] sm:$0xff]
    %v138 = vld [vmem:[%s3 + $0x60] sm:$0xff]
    %v139 = vld [vmem:[%s3 + $0x68] sm:$0xff]
    %v140 = vld [vmem:[%s3 + $0x70] sm:$0xff]
    %v141 = vld [vmem:[%s3 + $0x78] sm:$0xff]
    %v142 = vld [vmem:[%s4] sm:$0x1]
    %v144 = vlaneseq
    %v145 = vshrl.u32 %v144, 7
    %v146 = vsub.s32 0, %v145
    %v147 = vrot.slane %v142, %v146
    %149 = vmatprep.subr.mxu0 0.0
    %150 = vmatpush1.msra.mxu0 %v126
    %151 = vmatprep.subr.mxu0 0.0
    %152 = vmatpush1.msra.mxu0 %v127
    %153 = vmatprep.subr.mxu0 0.0
    %154 = vmatpush1.msra.mxu0 %v128
    %155 = vmatprep.subr.mxu0 0.0
    %156 = vmatpush1.msra.mxu0 %v129
    %157 = vmatprep.subr.mxu0 0.0
    %158 = vmatpush1.msra.mxu0 %v130
    %159 = vmatprep.subr.mxu0 0.0
    %160 = vmatpush1.msra.mxu0 %v131
    %161 = vmatprep.subr.mxu0 0.0
    %162 = vmatpush1.msra.mxu0 %v132
    %163 = vmatprep.subr.mxu0 0.0
    %164 = vmatpush1.msra.mxu0 %v133
    %165 = vmatprep.subr.mxu0 0.0
    %166 = vmatpush1.msra.mxu0 %v134
    %167 = vmatprep.subr.mxu0 0.0
    %168 = vmatpush1.msra.mxu0 %v135
    %169 = vmatprep.subr.mxu0 0.0
    %170 = vmatpush1.msra.mxu0 %v136
    %171 = vmatprep.subr.mxu0 0.0
    %172 = vmatpush1.msra.mxu0 %v137
    %173 = vmatprep.subr.mxu0 0.0
    %174 = vmatpush1.msra.mxu0 %v138
    %175 = vmatprep.subr.mxu0 0.0
    %176 = vmatpush1.msra.mxu0 %v139
    %177 = vmatprep.subr.mxu0 0.0
    %178 = vmatpush1.msra.mxu0 %v140
    %179 = vmatprep.subr.mxu0 0.0
    %180 = vmatpush1.msra.mxu0 %v141
    %181 = vmatprep.subr.mxu0 0.0
    %182 = vmatpush1.msra.mxu0 0.0
    %183 = vmatprep.subr.mxu0 0.0
    %184 = vmatpush1.msra.mxu0 0.0
    %185 = vmatprep.subr.mxu0 0.0
    %186 = vmatpush1.msra.mxu0 0.0
    %187 = vmatprep.subr.mxu0 0.0
    %188 = vmatpush1.msra.mxu0 0.0
    %189 = vmatprep.subr.mxu0 0.0
    %190 = vmatpush1.msra.mxu0 0.0
    %191 = vmatprep.subr.mxu0 0.0
    %192 = vmatpush1.msra.mxu0 0.0
    %193 = vmatprep.subr.mxu0 0.0
    %194 = vmatpush1.msra.mxu0 0.0
    %195 = vmatprep.subr.mxu0 0.0
    %196 = vmatpush1.msra.mxu0 0.0
    %197 = vmatprep.subr.mxu0 0.0
    %198 = vmatpush1.msra.mxu0 0.0
    %199 = vmatprep.subr.mxu0 0.0
    %200 = vmatpush1.msra.mxu0 0.0
    %201 = vmatprep.subr.mxu0 0.0
    %202 = vmatpush1.msra.mxu0 0.0
    %203 = vmatprep.subr.mxu0 0.0
    %204 = vmatpush1.msra.mxu0 0.0
    %205 = vmatprep.subr.mxu0 0.0
    %206 = vmatpush1.msra.mxu0 0.0
    %207 = vmatprep.subr.mxu0 0.0
    %208 = vmatpush1.msra.mxu0 0.0
    %209 = vmatprep.subr.mxu0 0.0
    %210 = vmatpush1.msra.mxu0 0.0
    %211 = vmatprep.subr.mxu0 0.0
    %212 = vmatpush1.msra.mxu0 0.0
    %213 = vmatprep.mubr.f32.mxu0 0.0
    %214 = vmatmul.mubr.f32.gmra.mrb[0].mxu0 %v125
    %v215 = vpop.f32.mrb[0].mxu0
    %v216 = vadd.f32 %v147, %v215
    %v217 = vpop.f32.mrb[0].mxu0
    %218 = vdwg.mxu0
    %v219 = vmax.f32 %v216, 0.0
    %v220 = vld [vmem:[%s5] sm:$0xff]
    %v221 = vld [vmem:[%s5 + $0x8] sm:$0xff]
    %v222 = vld [vmem:[%s5 + $0x10] sm:$0xff]
    %v223 = vld [vmem:[%s5 + $0x18] sm:$0xff]
    %v224 = vld [vmem:[%s5 + $0x20] sm:$0xff]
    %v225 = vld [vmem:[%s5 + $0x28] sm:$0xff]
    %v226 = vld [vmem:[%s5 + $0x30] sm:$0xff]
    %v227 = vld [vmem:[%s5 + $0x38] sm:$0xff]
    %v228 = vld [vmem:[%s5 + $0x40] sm:$0xff]
    %v229 = vld [vmem:[%s5 + $0x48] sm:$0xff]
    %v230 = vld [vmem:[%s5 + $0x50] sm:$0xff]
    %v231 = vld [vmem:[%s5 + $0x58] sm:$0xff]
    %v232 = vld [vmem:[%s5 + $0x60] sm:$0xff]
    %v233 = vld [vmem:[%s5 + $0x68] sm:$0xff]
    %v234 = vld [vmem:[%s5 + $0x70] sm:$0xff]
    %v235 = vld [vmem:[%s5 + $0x78] sm:$0xff]
    %v236 = vld [vmem:[%s6] sm:$0x1]
    %v238 = vlaneseq
    %v239 = vshrl.u32 %v238, 7
    %v240 = vsub.s32 0, %v239
    %v241 = vrot.slane %v236, %v240
    %243 = vmatprep.subr.mxu0 0.0
    %244 = vmatpush1.msra.mxu0 %v220
    %245 = vmatprep.subr.mxu0 0.0
    %246 = vmatpush1.msra.mxu0 %v221
    %247 = vmatprep.subr.mxu0 0.0
    %248 = vmatpush1.msra.mxu0 %v222
    %249 = vmatprep.subr.mxu0 0.0
    %250 = vmatpush1.msra.mxu0 %v223
    %251 = vmatprep.subr.mxu0 0.0
    %252 = vmatpush1.msra.mxu0 %v224
    %253 = vmatprep.subr.mxu0 0.0
    %254 = vmatpush1.msra.mxu0 %v225
    %255 = vmatprep.subr.mxu0 0.0
    %256 = vmatpush1.msra.mxu0 %v226
    %257 = vmatprep.subr.mxu0 0.0
    %258 = vmatpush1.msra.mxu0 %v227
    %259 = vmatprep.subr.mxu0 0.0
    %260 = vmatpush1.msra.mxu0 %v228
    %261 = vmatprep.subr.mxu0 0.0
    %262 = vmatpush1.msra.mxu0 %v229
    %263 = vmatprep.subr.mxu0 0.0
    %264 = vmatpush1.msra.mxu0 %v230
    %265 = vmatprep.subr.mxu0 0.0
    %266 = vmatpush1.msra.mxu0 %v231
    %267 = vmatprep.subr.mxu0 0.0
    %268 = vmatpush1.msra.mxu0 %v232
    %269 = vmatprep.subr.mxu0 0.0
    %270 = vmatpush1.msra.mxu0 %v233
    %271 = vmatprep.subr.mxu0 0.0
    %272 = vmatpush1.msra.mxu0 %v234
    %273 = vmatprep.subr.mxu0 0.0
    %274 = vmatpush1.msra.mxu0 %v235
    %275 = vmatprep.subr.mxu0 0.0
    %276 = vmatpush1.msra.mxu0 0.0
    %277 = vmatprep.subr.mxu0 0.0
    %278 = vmatpush1.msra.mxu0 0.0
    %279 = vmatprep.subr.mxu0 0.0
    %280 = vmatpush1.msra.mxu0 0.0
    %281 = vmatprep.subr.mxu0 0.0
    %282 = vmatpush1.msra.mxu0 0.0
    %283 = vmatprep.subr.mxu0 0.0
    %284 = vmatpush1.msra.mxu0 0.0
    %285 = vmatprep.subr.mxu0 0.0
    %286 = vmatpush1.msra.mxu0 0.0
    %287 = vmatprep.subr.mxu0 0.0
    %288 = vmatpush1.msra.mxu0 0.0
    %289 = vmatprep.subr.mxu0 0.0
    %290 = vmatpush1.msra.mxu0 0.0
    %291 = vmatprep.subr.mxu0 0.0
    %292 = vmatpush1.msra.mxu0 0.0
    %293 = vmatprep.subr.mxu0 0.0
    %294 = vmatpush1.msra.mxu0 0.0
    %295 = vmatprep.subr.mxu0 0.0
    %296 = vmatpush1.msra.mxu0 0.0
    %297 = vmatprep.subr.mxu0 0.0
    %298 = vmatpush1.msra.mxu0 0.0
    %299 = vmatprep.subr.mxu0 0.0
    %300 = vmatpush1.msra.mxu0 0.0
    %301 = vmatprep.subr.mxu0 0.0
    %302 = vmatpush1.msra.mxu0 0.0
    %303 = vmatprep.subr.mxu0 0.0
    %304 = vmatpush1.msra.mxu0 0.0
    %305 = vmatprep.subr.mxu0 0.0
    %306 = vmatpush1.msra.mxu0 0.0
    %307 = vmatprep.mubr.f32.mxu0 0.0
    %308 = vmatmul.mubr.f32.gmra.mrb[0].mxu0 %v219
    %v309 = vpop.f32.mrb[0].mxu0
    %v310 = vadd.f32 %v241, %v309
    %v311 = vpop.f32.mrb[0].mxu0
    %312 = vdwg.mxu0
    %v313 = vtanh.pop %v310
    %vm314 = vcmask 31744
    %315 = vst.msk [vmem:[#allocation5] sm:$0xff] %vm314, %v313
    // Predicated region
    $region34: #{tpu_custom_call.1} parent=1 // pred_check
      _
    $region35: #{tpu_custom_call.1} parent=1 // pred_check_branch
      %317 = sbr.rel (0) target = $region37
    $region36: #{tpu_custom_call.1} parent=1 // pred_region
      %s319 = ssub.s32 128, 32
      %320 = vsyncadd [#allocation4], %s319
      %s321 = sshll.u32 [#allocation5], 4
      %s322 = int_to_ptr.vmem [resolvable:$true] %s321
      %327 = dma.vmem_to_hbm [thread:$0]  %s322, 32, %s7, [#allocation4], 32, 32, 2
    $region37: #{tpu_custom_call.1} parent=1 // pred_fallthru
      _
    // Predicated region
    $region38: #{tpu_custom_call.1} parent=1 // pred_check
      _
    $region39: #{tpu_custom_call.1} parent=1 // pred_check_branch
      %329 = sbr.rel (0) target = $region41
    $region40: #{tpu_custom_call.1} parent=1 // pred_region
      %330 = dma.done [#allocation4], 128
    $region41: #{tpu_custom_call.1} parent=1 // pred_fallthru
      _
    %331 = vsyncpa [#allocation3], 1
    %332 = vsyncpa [#allocation4], 1

</llo_original>
